<compile_context>
chip_gen: v5e
topology: v5e:2x2
jax: 0.10.0
libtpu: 0.0.40
codegen_flags: <defaults>
</compile_context>

<pallas_src>
import jax
import jax.numpy as jnp
from jax import lax
from jax.experimental import pallas as pl
from jax.experimental.pallas import tpu as pltpu


def _fused_forward_kernel(x_ref, wlT_ref, bl_ref, wk1_ref, b1_ref,
                          wk2_ref, b2_ref, x1_ref, x2_ref):
    x = x_ref[0]                                              # (C*H, W)
    # Linear over the last (feature) dim.
    t = jnp.dot(x, wlT_ref[...], preferred_element_type=jnp.float32,
                precision=lax.Precision.HIGHEST) + bl_ref[...]
    # conv1 (1x1) with BatchNorm folded in: kron(W1_eff, I_H) @ t + b1_eff.
    z = jnp.dot(wk1_ref[...], t, preferred_element_type=jnp.float32,
                precision=lax.Precision.HIGHEST) + b1_ref[...]
    x1 = jnp.maximum(z, 0.0)                                  # ReLU
    # conv2 (1x1): kron(W2, I_H) @ x1 + b2.
    x2 = jnp.dot(wk2_ref[...], x1, preferred_element_type=jnp.float32,
                 precision=lax.Precision.HIGHEST) + b2_ref[...]
    x1_ref[0] = x1.astype(x1_ref.dtype)
    x2_ref[0] = x2.astype(x2_ref.dtype)


def multiple_output_forward(inp, params):
    """inp: (N, C, H, W) with C=3, W=32. Returns (x1, x2), both (N, C, H, W)."""
    Wl, bl, W1, b1, gamma, beta, rmean, rvar, eps, W2, b2 = params
    N, C, H, W = inp.shape
    R = C * H

    # ---- one-time parameter preprocessing (wrapper) ----------------------
    scale = gamma / jnp.sqrt(rvar + eps)                 # BN inference affine
    shift = beta - rmean * scale
    W1_eff = scale[:, None] * W1                         # fold BN into conv1
    b1_eff = scale * b1 + shift
    eye_h = jnp.eye(H, dtype=inp.dtype)
    wk1 = jnp.kron(W1_eff, eye_h)                        # (R, R)
    wk2 = jnp.kron(W2, eye_h)                            # (R, R)
    b1r = jnp.repeat(b1_eff, H)[:, None]                 # (R, 1)
    b2r = jnp.repeat(b2, H)[:, None]                     # (R, 1)
    wlT = Wl.T                                           # (W, W)
    bl2 = bl[None, :]                                    # (1, W)

    # ---- layout plumbing: (N, C, H, W) -> (N, C*H, W) --------------------
    x2d = inp.reshape(N, R, W)

    def param_spec(shape):
        return pl.BlockSpec(shape, lambda n: (0, 0))

    batch_spec = pl.BlockSpec((1, R, W), lambda n: (n, 0, 0))

    x1f, x2f = pl.pallas_call(
        _fused_forward_kernel,
        out_shape=(jax.ShapeDtypeStruct((N, R, W), inp.dtype),
                   jax.ShapeDtypeStruct((N, R, W), inp.dtype)),
        grid=(N,),
        in_specs=[
            batch_spec,             # input activations, one batch per step
            param_spec((W, W)),     # linear weight (transposed)
            param_spec((1, W)),     # linear bias
            param_spec((R, R)),     # conv1 weight (BN-folded, kron'd with I_H)
            param_spec((R, 1)),     # conv1 bias  (BN-folded, repeated over H)
            param_spec((R, R)),     # conv2 weight (kron'd with I_H)
            param_spec((R, 1)),     # conv2 bias
        ],
        out_specs=(batch_spec, batch_spec),
        compiler_params=pltpu.CompilerParams(
            dimension_semantics=("parallel",)),
    )(x2d, wlT, bl2, wk1, b1r, wk2, b2r)

    return x1f.reshape(N, C, H, W), x2f.reshape(N, C, H, W)


def _reference_forward(inp, params):
    """Plain-JAX reference matching the PyTorch forward (eval-mode BN)."""
    Wl, bl, W1, b1, gamma, beta, rmean, rvar, eps, W2, b2 = params
    hp = lax.Precision.HIGHEST
    x = jnp.einsum('nchw,ow->ncho', inp, Wl, precision=hp) + bl
    x = jnp.einsum('ck,nkhw->nchw', W1, x, precision=hp) + b1[None, :, None, None]
    x = (x - rmean[None, :, None, None]) / jnp.sqrt(rvar[None, :, None, None] + eps)
    x = x * gamma[None, :, None, None] + beta[None, :, None, None]
    x1 = jnp.maximum(x, 0.0)
    x2 = jnp.einsum('ck,nkhw->nchw', W2, x1, precision=hp) + b2[None, :, None, None]
    return x1, x2


if __name__ == "__main__":
    key = jax.random.PRNGKey(0)
    ks = jax.random.split(key, 11)
    # Small NCHW input consistent with the module: 3 channels, last dim 32
    # so that Linear(32, 32) applies over the last dimension.
    N, C, H, W = 2, 3, 8, 32

    inp = jax.random.normal(ks[0], (N, C, H, W), dtype=jnp.float32)
    Wl = jax.random.normal(ks[1], (W, W), jnp.float32) * 0.1     # Linear weight (out, in)
    bl = jax.random.normal(ks[2], (W,), jnp.float32) * 0.1       # Linear bias
    W1 = jax.random.normal(ks[3], (C, C), jnp.float32) * 0.3     # conv1 1x1 weight (squeezed)
    b1 = jax.random.normal(ks[4], (C,), jnp.float32) * 0.1
    gamma = 1.0 + 0.1 * jax.random.normal(ks[5], (C,), jnp.float32)
    beta = 0.1 * jax.random.normal(ks[6], (C,), jnp.float32)
    rmean = 0.1 * jax.random.normal(ks[7], (C,), jnp.float32)
    rvar = jax.random.uniform(ks[8], (C,), jnp.float32, 0.5, 1.5)
    eps = 1e-5                                                   # BatchNorm2d default
    W2 = jax.random.normal(ks[9], (C, C), jnp.float32) * 0.3     # conv2 1x1 weight (squeezed)
    b2 = jax.random.normal(ks[10], (C,), jnp.float32) * 0.1

    params = (Wl, bl, W1, b1, gamma, beta, rmean, rvar, eps, W2, b2)

    x1, x2 = multiple_output_forward(inp, params)
    x1 = jax.block_until_ready(x1)
    x2 = jax.block_until_ready(x2)

    r1, r2 = _reference_forward(inp, params)
    assert jnp.allclose(x1, r1, atol=1e-4, rtol=1e-4), "x1 mismatch vs reference"
    assert jnp.allclose(x2, r2, atol=1e-4, rtol=1e-4), "x2 mismatch vs reference"

    print("KERNEL_OK")
</pallas_src>

<mosaic_0001>
module attributes {stable_mosaic.version = 11 : i64} {
  func.func @_fused_forward_kernel(%arg0: i32, %arg1: memref<1x24x32xf32, #tpu.memory_space<vmem>>, %arg2: memref<32x32xf32, #tpu.memory_space<vmem>>, %arg3: memref<1x32xf32, #tpu.memory_space<vmem>>, %arg4: memref<24x24xf32, #tpu.memory_space<vmem>>, %arg5: memref<24x1xf32, #tpu.memory_space<vmem>>, %arg6: memref<24x24xf32, #tpu.memory_space<vmem>>, %arg7: memref<24x1xf32, #tpu.memory_space<vmem>>, %arg8: memref<1x24x32xf32, #tpu.memory_space<vmem>>, %arg9: memref<1x24x32xf32, #tpu.memory_space<vmem>>) attributes {dimension_semantics = [#tpu.dimension_semantics<parallel>], iteration_bounds = array<i64: 2>, scalar_prefetch = 0 : i64, scratch_operands = 0 : i64, tpu.core_type = #tpu.core_type<tc>, window_params = [{transform_indices = @transform_0, window_bounds = array<i64: 1, 24, 32>}, {pipeline_mode = #tpu.pipeline_mode<synchronous>, transform_indices = @transform_1, window_bounds = array<i64: 32, 32>}, {pipeline_mode = #tpu.pipeline_mode<synchronous>, transform_indices = @transform_2, window_bounds = array<i64: 1, 32>}, {pipeline_mode = #tpu.pipeline_mode<synchronous>, transform_indices = @transform_3, window_bounds = array<i64: 24, 24>}, {pipeline_mode = #tpu.pipeline_mode<synchronous>, transform_indices = @transform_4, window_bounds = array<i64: 24, 1>}, {pipeline_mode = #tpu.pipeline_mode<synchronous>, transform_indices = @transform_5, window_bounds = array<i64: 24, 24>}, {pipeline_mode = #tpu.pipeline_mode<synchronous>, transform_indices = @transform_6, window_bounds = array<i64: 24, 1>}, {transform_indices = @transform_7, window_bounds = array<i64: 1, 24, 32>}, {transform_indices = @transform_8, window_bounds = array<i64: 1, 24, 32>}]} {
    %c0 = arith.constant 0 : index
    %c0_0 = arith.constant 0 : index
    %c0_1 = arith.constant 0 : index
    %0 = vector.load %arg1[%c0, %c0_0, %c0_1] : memref<1x24x32xf32, #tpu.memory_space<vmem>>, vector<1x24x32xf32>
    %1 = vector.shape_cast %0 : vector<1x24x32xf32> to vector<24x32xf32>
    %c0_2 = arith.constant 0 : index
    %c0_3 = arith.constant 0 : index
    %2 = vector.load %arg2[%c0_2, %c0_3] : memref<32x32xf32, #tpu.memory_space<vmem>>, vector<32x32xf32>
    %cst = arith.constant dense<0.000000e+00> : vector<24x32xf32>
    %3 = tpu.matmul %1, %2, %cst {dimension_numbers = #tpu.dot_dimension_numbers<[1], [0], [0], [1], [0, 0, 1, 1], [], []>, precision = #tpu.contract_precision<fp32>} : vector<24x32xf32>, vector<32x32xf32>, vector<24x32xf32> -> vector<24x32xf32>
    %c0_4 = arith.constant 0 : index
    %c0_5 = arith.constant 0 : index
    %4 = vector.load %arg3[%c0_4, %c0_5] : memref<1x32xf32, #tpu.memory_space<vmem>>, vector<1x32xf32>
    %5 = vector.broadcast %4 : vector<1x32xf32> to vector<24x32xf32>
    %6 = arith.addf %3, %5 : vector<24x32xf32>
    %c0_6 = arith.constant 0 : index
    %c0_7 = arith.constant 0 : index
    %7 = vector.load %arg4[%c0_6, %c0_7] : memref<24x24xf32, #tpu.memory_space<vmem>>, vector<24x24xf32>
    %cst_8 = arith.constant dense<0.000000e+00> : vector<24x32xf32>
    %8 = tpu.matmul %7, %6, %cst_8 {dimension_numbers = #tpu.dot_dimension_numbers<[1], [0], [0], [1], [0, 0, 1, 1], [], []>, precision = #tpu.contract_precision<fp32>} : vector<24x24xf32>, vector<24x32xf32>, vector<24x32xf32> -> vector<24x32xf32>
    %c0_9 = arith.constant 0 : index
    %c0_10 = arith.constant 0 : index
    %9 = vector.load %arg5[%c0_9, %c0_10] : memref<24x1xf32, #tpu.memory_space<vmem>>, vector<24x1xf32>
    %10 = vector.broadcast %9 : vector<24x1xf32> to vector<24x32xf32>
    %11 = arith.addf %8, %10 : vector<24x32xf32>
    %cst_11 = arith.constant 0.000000e+00 : f32
    %12 = vector.broadcast %cst_11 : f32 to vector<24x32xf32>
    %13 = arith.maximumf %11, %12 : vector<24x32xf32>
    %c0_12 = arith.constant 0 : index
    %c0_13 = arith.constant 0 : index
    %14 = vector.load %arg6[%c0_12, %c0_13] : memref<24x24xf32, #tpu.memory_space<vmem>>, vector<24x24xf32>
    %cst_14 = arith.constant dense<0.000000e+00> : vector<24x32xf32>
    %15 = tpu.matmul %14, %13, %cst_14 {dimension_numbers = #tpu.dot_dimension_numbers<[1], [0], [0], [1], [0, 0, 1, 1], [], []>, precision = #tpu.contract_precision<fp32>} : vector<24x24xf32>, vector<24x32xf32>, vector<24x32xf32> -> vector<24x32xf32>
    %c0_15 = arith.constant 0 : index
    %c0_16 = arith.constant 0 : index
    %16 = vector.load %arg7[%c0_15, %c0_16] : memref<24x1xf32, #tpu.memory_space<vmem>>, vector<24x1xf32>
    %17 = vector.broadcast %16 : vector<24x1xf32> to vector<24x32xf32>
    %18 = arith.addf %15, %17 : vector<24x32xf32>
    %c0_17 = arith.constant 0 : index
    %c0_18 = arith.constant 0 : index
    %c0_19 = arith.constant 0 : index
    %19 = vector.load %arg8[%c0_17, %c0_18, %c0_19] : memref<1x24x32xf32, #tpu.memory_space<vmem>>, vector<1x24x32xf32>
    %20 = vector.shape_cast %19 : vector<1x24x32xf32> to vector<24x32xf32>
    %21 = vector.shape_cast %13 : vector<24x32xf32> to vector<1x24x32xf32>
    tpu.vector_store %arg8[%c0_17, %c0_18, %c0_19], %21 {strides = array<i32>} : memref<1x24x32xf32, #tpu.memory_space<vmem>>, vector<1x24x32xf32>,
    %c0_20 = arith.constant 0 : index
    %c0_21 = arith.constant 0 : index
    %c0_22 = arith.constant 0 : index
    %22 = vector.load %arg9[%c0_20, %c0_21, %c0_22] : memref<1x24x32xf32, #tpu.memory_space<vmem>>, vector<1x24x32xf32>
    %23 = vector.shape_cast %22 : vector<1x24x32xf32> to vector<24x32xf32>
    %24 = vector.shape_cast %18 : vector<24x32xf32> to vector<1x24x32xf32>
    tpu.vector_store %arg9[%c0_20, %c0_21, %c0_22], %24 {strides = array<i32>} : memref<1x24x32xf32, #tpu.memory_space<vmem>>, vector<1x24x32xf32>,
    return
  }
  func.func @transform_0(%arg0: i32) -> (i32, i32, i32) {
    %c0_i32 = arith.constant 0 : i32
    %c0_i32_0 = arith.constant 0 : i32
    %c0_i32_1 = arith.constant 0 : i32
    return %arg0, %c0_i32, %c0_i32_0 : i32, i32, i32
  }
  func.func @transform_1(%arg0: i32) -> (i32, i32) {
    %c0_i32 = arith.constant 0 : i32
    %c0_i32_0 = arith.constant 0 : i32
    %c0_i32_1 = arith.constant 0 : i32
    return %c0_i32, %c0_i32_0 : i32, i32
  }
  func.func @transform_2(%arg0: i32) -> (i32, i32) {
    %c0_i32 = arith.constant 0 : i32
    %c0_i32_0 = arith.constant 0 : i32
    %c0_i32_1 = arith.constant 0 : i32
    return %c0_i32, %c0_i32_0 : i32, i32
  }
  func.func @transform_3(%arg0: i32) -> (i32, i32) {
    %c0_i32 = arith.constant 0 : i32
    %c0_i32_0 = arith.constant 0 : i32
    %c0_i32_1 = arith.constant 0 : i32
    return %c0_i32, %c0_i32_0 : i32, i32
  }
  func.func @transform_4(%arg0: i32) -> (i32, i32) {
    %c0_i32 = arith.constant 0 : i32
    %c0_i32_0 = arith.constant 0 : i32
    %c0_i32_1 = arith.constant 0 : i32
    return %c0_i32, %c0_i32_0 : i32, i32
  }
  func.func @transform_5(%arg0: i32) -> (i32, i32) {
    %c0_i32 = arith.constant 0 : i32
    %c0_i32_0 = arith.constant 0 : i32
    %c0_i32_1 = arith.constant 0 : i32
    return %c0_i32, %c0_i32_0 : i32, i32
  }
  func.func @transform_6(%arg0: i32) -> (i32, i32) {
    %c0_i32 = arith.constant 0 : i32
    %c0_i32_0 = arith.constant 0 : i32
    %c0_i32_1 = arith.constant 0 : i32
    return %c0_i32, %c0_i32_0 : i32, i32
  }
  func.func @transform_7(%arg0: i32) -> (i32, i32, i32) {
    %c0_i32 = arith.constant 0 : i32
    %c0_i32_0 = arith.constant 0 : i32
    %c0_i32_1 = arith.constant 0 : i32
    return %arg0, %c0_i32, %c0_i32_0 : i32, i32, i32
  }
  func.func @transform_8(%arg0: i32) -> (i32, i32, i32) {
    %c0_i32 = arith.constant 0 : i32
    %c0_i32_0 = arith.constant 0 : i32
    %c0_i32_1 = arith.constant 0 : i32
    return %arg0, %c0_i32, %c0_i32_0 : i32, i32, i32
  }
}

</mosaic_0001>

<llo_original>
// kernel: tpu_custom_call.1
$region0: #{tpu_custom_call.1}
  #allocation0 [shape = 'u32[]', space=smem, size = 0x4, offset = 0x4, fixed_abs, tag = 'smem constant byte address 0x4 - core index']
  #allocation1 [shape = 'u32[72,128]{1,0:T(1,128)}', space=vmem, size = 0x9000, scoped, tag = 'internal scratch']
  %s0 = inlined_call_operand.vmem [shape: f32[2,24,32], index: 0, kind: input, shape index: {}]
  %s1 = inlined_call_operand.hbm [shape: f32[32,32], index: 1, kind: input, shape index: {}]
  %s2 = inlined_call_operand.vmem [shape: f32[1,32], index: 2, kind: input, shape index: {}]
  %s3 = inlined_call_operand.hbm [shape: f32[24,24], index: 3, kind: input, shape index: {}]
  %s4 = inlined_call_operand.vmem [shape: f32[24,1], index: 4, kind: input, shape index: {}]
  %s5 = inlined_call_operand.hbm [shape: f32[24,24], index: 5, kind: input, shape index: {}]
  %s6 = inlined_call_operand.vmem [shape: f32[24,1], index: 6, kind: input, shape index: {}]
  %s7 = inlined_call_operand.hbm [shape: f32[2,24,32], index: 7, kind: output, shape index: {0}]
  %s8 = inlined_call_operand.hbm [shape: f32[2,24,32], index: 8, kind: output, shape index: {1}]
  %9 = xla_tuple %s7, %s8
  %s10 = sld [smem:[#allocation0]]
  $region81: #{tpu_custom_call.1} parent=0
    _
  %s12 = ssub.s32 1, %s10
  %s13 = scalar_select 0, %s12, %s10
  $region1: #{tpu_custom_call.1} parent=0
    #allocation2 [shape = 'u8[16384]{0}', space=vmem, size = 0x4000, scoped, tag = 'input window, operand 1, single buffered']
    #allocation3 [shape = 's32[2]{0}', space=sflag, size = 0x8, scoped, tag = 'scoped memory for tpu_custom_call.1']
    #allocation4 [shape = 's32[2]{0}', space=sflag, size = 0x8, scoped, tag = 'scoped memory for tpu_custom_call.1']
    #allocation5 [shape = 'u8[12288]{0}', space=vmem, size = 0x3000, scoped, tag = 'input window, operand 3, single buffered']
    #allocation6 [shape = 's32[1]{0}', space=sflag, size = 0x4, scoped, tag = 'scoped memory for tpu_custom_call.1']
    #allocation7 [shape = 'u8[12288]{0}', space=vmem, size = 0x3000, scoped, tag = 'input window, operand 5, single buffered']
    #allocation8 [shape = 'u8[24576]{0}', space=vmem, size = 0x6000, scoped, tag = 'output window, operand 0']
    #allocation9 [shape = 'u8[24576]{0}', space=vmem, size = 0x6000, scoped, tag = 'output window, operand 1']
    #allocation10 [shape = 's32[2]{0}', space=sflag, size = 0x8, scoped, tag = 'scoped memory for tpu_custom_call.1']
    %14 = vsyncpa [#allocation3], 0
    %15 = vsyncpa [#allocation6], 0
    %16 = vsyncpa [#allocation4], 0
    %s17 = scalar_lea.sflag [#allocation4], 1
    %18 = vsyncpa %s17, 0
    %19 = vsyncpa [#allocation10], 0
    %s20 = scalar_lea.sflag [#allocation10], 1
    %21 = vsyncpa %s20, 0
    loop: start=0, step=1, limit=4
    $region2: #{tpu_custom_call.1} parent=1 // loop_pre_header
      _
    $region3: #{tpu_custom_call.1} parent=1 // loop_header
      %s23 = sphi 0, %s27
      %p24 = scmp.ge.s32.totalorder %s23, 4
      %s33 = sphi 0, %s35
      %s36 = sphi 0, %s33
      %s37 = sphi 0, %s36
      %s53 = sphi 0, %s37
      %s57 = sphi 0, %s57
      %s59 = sphi 0, %s57
      %s60 = sphi 0, %s59
      %s74 = sphi 0, %s60
      %s78 = sphi 0, %s78
      %s80 = sphi 0, %s78
      %s81 = sphi 0, %s80
      %s95 = sphi 0, %s81
      %s99 = sphi 0, %s99
      %s101 = sphi 0, %s99
      %s102 = sphi 0, %s101
      %s116 = sphi 0, %s102
      %s120 = sphi 0, %s120
      %s122 = sphi 0, %s120
      %s123 = sphi 0, %s122
      %s137 = sphi 0, %s123
      %s141 = sphi 0, %s141
      %s143 = sphi 0, %s141
      %s144 = sphi 0, %s143
      %s158 = sphi 0, %s144
      %s162 = sphi 0, %s162
      %s164 = sphi 0, %s162
      %s165 = sphi 0, %s164
      %s179 = sphi 0, %s165
      %s185 = sphi 0, %s187
      %s188 = sphi 0, %s185
      %s189 = sphi 0, %s188
      %s205 = sphi 0, %s189
      %s211 = sphi 0, %s213
      %s214 = sphi 0, %s211
      %s215 = sphi 0, %s214
      %s231 = sphi 0, %s215
    $region4: #{tpu_custom_call.1} parent=1 // loop_header_branch
      %26 = sbr.rel (%p24) target = $region8
    $region5: #{tpu_custom_call.1} parent=1 // loop_body
      %s28 = ssub.s32 %s23, 1
      %s29 = ssub.s32 %s23, 2
      %s30 = sadd.s32 %s23, 1
      %s31 = ssub.s32 %s23, %s30
      %p32 = scmp.eq.s32.totalorder %s31, 0
      %s34 = sadd.s32 %s33, 1
      %s35 = scalar_select %p32, %s33, %s34
      %p38 = pneg %p32
      %p39 = scmp.eq.s32.totalorder %s23, 1
      %p40 = por %p38, %p39
      %p41 = scmp.ne.s32.totalorder %s33, %s36
      %p42 = scmp.eq.s32.totalorder %s23, 0
      %p43 = por %p41, %p42
      %p44 = scmp.ne.s32.totalorder %s33, %s36
      %p45 = scmp.eq.s32.totalorder %s28, 1
      %p46 = por %p44, %p45
      %p47 = scmp.ne.s32.totalorder %s36, %s37
      %p48 = scmp.eq.s32.totalorder %s28, 0
      %p49 = por %p47, %p48
      %p50 = scmp.ne.s32.totalorder %s36, %s37
      %p51 = scmp.eq.s32.totalorder %s29, 1
      %p52 = por %p50, %p51
      %p54 = scmp.ne.s32.totalorder %s37, %s53
      %p55 = scmp.eq.s32.totalorder %s29, 0
      %p56 = por %p54, %p55
      %s58 = sadd.s32 %s57, 1
      %p61 = scmp.eq.s32.totalorder %s23, 1
      %p62 = scmp.ne.s32.totalorder %s57, %s59
      %p63 = scmp.eq.s32.totalorder %s23, 0
      %p64 = por %p62, %p63
      %p65 = scmp.ne.s32.totalorder %s57, %s59
      %p66 = scmp.eq.s32.totalorder %s28, 1
      %p67 = por %p65, %p66
      %p68 = scmp.ne.s32.totalorder %s59, %s60
      %p69 = scmp.eq.s32.totalorder %s28, 0
      %p70 = por %p68, %p69
      %p71 = scmp.ne.s32.totalorder %s59, %s60
      %p72 = scmp.eq.s32.totalorder %s29, 1
      %p73 = por %p71, %p72
      %p75 = scmp.ne.s32.totalorder %s60, %s74
      %p76 = scmp.eq.s32.totalorder %s29, 0
      %p77 = por %p75, %p76
      %s79 = sadd.s32 %s78, 1
      %p82 = scmp.eq.s32.totalorder %s23, 1
      %p83 = scmp.ne.s32.totalorder %s78, %s80
      %p84 = scmp.eq.s32.totalorder %s23, 0
      %p85 = por %p83, %p84
      %p86 = scmp.ne.s32.totalorder %s78, %s80
      %p87 = scmp.eq.s32.totalorder %s28, 1
      %p88 = por %p86, %p87
      %p89 = scmp.ne.s32.totalorder %s80, %s81
      %p90 = scmp.eq.s32.totalorder %s28, 0
      %p91 = por %p89, %p90
      %p92 = scmp.ne.s32.totalorder %s80, %s81
      %p93 = scmp.eq.s32.totalorder %s29, 1
      %p94 = por %p92, %p93
      %p96 = scmp.ne.s32.totalorder %s81, %s95
      %p97 = scmp.eq.s32.totalorder %s29, 0
      %p98 = por %p96, %p97
      %s100 = sadd.s32 %s99, 1
      %p103 = scmp.eq.s32.totalorder %s23, 1
      %p104 = scmp.ne.s32.totalorder %s99, %s101
      %p105 = scmp.eq.s32.totalorder %s23, 0
      %p106 = por %p104, %p105
      %p107 = scmp.ne.s32.totalorder %s99, %s101
      %p108 = scmp.eq.s32.totalorder %s28, 1
      %p109 = por %p107, %p108
      %p110 = scmp.ne.s32.totalorder %s101, %s102
      %p111 = scmp.eq.s32.totalorder %s28, 0
      %p112 = por %p110, %p111
      %p113 = scmp.ne.s32.totalorder %s101, %s102
      %p114 = scmp.eq.s32.totalorder %s29, 1
      %p115 = por %p113, %p114
      %p117 = scmp.ne.s32.totalorder %s102, %s116
      %p118 = scmp.eq.s32.totalorder %s29, 0
      %p119 = por %p117, %p118
      %s121 = sadd.s32 %s120, 1
      %p124 = scmp.eq.s32.totalorder %s23, 1
      %p125 = scmp.ne.s32.totalorder %s120, %s122
      %p126 = scmp.eq.s32.totalorder %s23, 0
      %p127 = por %p125, %p126
      %p128 = scmp.ne.s32.totalorder %s120, %s122
      %p129 = scmp.eq.s32.totalorder %s28, 1
      %p130 = por %p128, %p129
      %p131 = scmp.ne.s32.totalorder %s122, %s123
      %p132 = scmp.eq.s32.totalorder %s28, 0
      %p133 = por %p131, %p132
      %p134 = scmp.ne.s32.totalorder %s122, %s123
      %p135 = scmp.eq.s32.totalorder %s29, 1
      %p136 = por %p134, %p135
      %p138 = scmp.ne.s32.totalorder %s123, %s137
      %p139 = scmp.eq.s32.totalorder %s29, 0
      %p140 = por %p138, %p139
      %s142 = sadd.s32 %s141, 1
      %p145 = scmp.eq.s32.totalorder %s23, 1
      %p146 = scmp.ne.s32.totalorder %s141, %s143
      %p147 = scmp.eq.s32.totalorder %s23, 0
      %p148 = por %p146, %p147
      %p149 = scmp.ne.s32.totalorder %s141, %s143
      %p150 = scmp.eq.s32.totalorder %s28, 1
      %p151 = por %p149, %p150
      %p152 = scmp.ne.s32.totalorder %s143, %s144
      %p153 = scmp.eq.s32.totalorder %s28, 0
      %p154 = por %p152, %p153
      %p155 = scmp.ne.s32.totalorder %s143, %s144
      %p156 = scmp.eq.s32.totalorder %s29, 1
      %p157 = por %p155, %p156
      %p159 = scmp.ne.s32.totalorder %s144, %s158
      %p160 = scmp.eq.s32.totalorder %s29, 0
      %p161 = por %p159, %p160
      %s163 = sadd.s32 %s162, 1
      %p166 = scmp.eq.s32.totalorder %s23, 1
      %p167 = scmp.ne.s32.totalorder %s162, %s164
      %p168 = scmp.eq.s32.totalorder %s23, 0
      %p169 = por %p167, %p168
      %p170 = scmp.ne.s32.totalorder %s162, %s164
      %p171 = scmp.eq.s32.totalorder %s28, 1
      %p172 = por %p170, %p171
      %p173 = scmp.ne.s32.totalorder %s164, %s165
      %p174 = scmp.eq.s32.totalorder %s28, 0
      %p175 = por %p173, %p174
      %p176 = scmp.ne.s32.totalorder %s164, %s165
      %p177 = scmp.eq.s32.totalorder %s29, 1
      %p178 = por %p176, %p177
      %p180 = scmp.ne.s32.totalorder %s165, %s179
      %p181 = scmp.eq.s32.totalorder %s29, 0
      %p182 = por %p180, %p181
      %s183 = ssub.s32 %s23, %s30
      %p184 = scmp.eq.s32.totalorder %s183, 0
      %s186 = sadd.s32 %s185, 1
      %s187 = scalar_select %p184, %s185, %s186
      %p190 = pneg %p184
      %p191 = scmp.eq.s32.totalorder %s23, 1
      %p192 = por %p190, %p191
      %p193 = scmp.ne.s32.totalorder %s185, %s188
      %p194 = scmp.eq.s32.totalorder %s23, 0
      %p195 = por %p193, %p194
      %p196 = scmp.ne.s32.totalorder %s185, %s188
      %p197 = scmp.eq.s32.totalorder %s28, 1
      %p198 = por %p196, %p197
      %p199 = scmp.ne.s32.totalorder %s188, %s189
      %p200 = scmp.eq.s32.totalorder %s28, 0
      %p201 = por %p199, %p200
      %p202 = scmp.ne.s32.totalorder %s188, %s189
      %p203 = scmp.eq.s32.totalorder %s29, 1
      %p204 = por %p202, %p203
      %p206 = scmp.ne.s32.totalorder %s189, %s205
      %p207 = scmp.eq.s32.totalorder %s29, 0
      %p208 = por %p206, %p207
      %s209 = ssub.s32 %s23, %s30
      %p210 = scmp.eq.s32.totalorder %s209, 0
      %s212 = sadd.s32 %s211, 1
      %s213 = scalar_select %p210, %s211, %s212
      %p216 = pneg %p210
      %p217 = scmp.eq.s32.totalorder %s23, 1
      %p218 = por %p216, %p217
      %p219 = scmp.ne.s32.totalorder %s211, %s214
      %p220 = scmp.eq.s32.totalorder %s23, 0
      %p221 = por %p219, %p220
      %p222 = scmp.ne.s32.totalorder %s211, %s214
      %p223 = scmp.eq.s32.totalorder %s28, 1
      %p224 = por %p222, %p223
      %p225 = scmp.ne.s32.totalorder %s214, %s215
      %p226 = scmp.eq.s32.totalorder %s28, 0
      %p227 = por %p225, %p226
      %p228 = scmp.ne.s32.totalorder %s214, %s215
      %p229 = scmp.eq.s32.totalorder %s29, 1
      %p230 = por %p228, %p229
      %p232 = scmp.ne.s32.totalorder %s215, %s231
      %p233 = scmp.eq.s32.totalorder %s29, 0
      %p234 = por %p232, %p233
      %p235 = scmp.le.s32.totalorder 1, %s23
      %p236 = scmp.lt.s32.totalorder %s23, 3
      %p237 = pnand %p235, %p236
      %p238 = pneg %p237
      // Predicated region
      $region9: #{tpu_custom_call.1} parent=5 // pred_check
        _
      $region10: #{tpu_custom_call.1} parent=5 // pred_check_branch
        %240 = sbr.rel (%p237) target = $region12
      $region11: #{tpu_custom_call.1} parent=5 // pred_region
        %s241 = ssub.s32 %s23, 1
        // Predicated region
        $region13: #{tpu_custom_call.1} parent=11 // pred_check
          %p242 = pneg %p70
        $region14: #{tpu_custom_call.1} parent=11 // pred_check_branch
          %244 = sbr.rel (%p242) target = $region16
        $region15: #{tpu_custom_call.1} parent=11 // pred_region
          %246 = vsyncadd [#allocation3], 0
          %s247 = sshll.u32 %s1, 4
          %s248 = int_to_ptr.hbm [resolvable:$true] %s247
          %s249 = sshll.u32 [#allocation2], 4
          %s250 = int_to_ptr.vmem [resolvable:$true] %s249
          %255 = dma.hbm_to_vmem [thread:$0]  %s248, 512, %s250, [#allocation3], 128, 128, 8
        $region16: #{tpu_custom_call.1} parent=11 // pred_fallthru
          _
        // Predicated region
        $region17: #{tpu_custom_call.1} parent=11 // pred_check
          %p256 = pneg %p91
        $region18: #{tpu_custom_call.1} parent=11 // pred_check_branch
          %258 = sbr.rel (%p256) target = $region20
        $region19: #{tpu_custom_call.1} parent=11 // pred_region
          _
        $region20: #{tpu_custom_call.1} parent=11 // pred_fallthru
          _
        // Predicated region
        $region21: #{tpu_custom_call.1} parent=11 // pred_check
          %p259 = pneg %p112
        $region22: #{tpu_custom_call.1} parent=11 // pred_check_branch
          %261 = sbr.rel (%p259) target = $region24
        $region23: #{tpu_custom_call.1} parent=11 // pred_region
          %263 = vsyncadd [#allocation6], 0
          %s264 = sshll.u32 %s3, 4
          %s265 = int_to_ptr.hbm [resolvable:$true] %s264
          %s266 = sshll.u32 [#allocation5], 4
          %s267 = int_to_ptr.vmem [resolvable:$true] %s266
          %272 = dma.hbm_to_vmem [thread:$0]  %s265, 384, %s267, [#allocation6], 128, 128, 8
        $region24: #{tpu_custom_call.1} parent=11 // pred_fallthru
          _
        // Predicated region
        $region25: #{tpu_custom_call.1} parent=11 // pred_check
          %p273 = pneg %p133
        $region26: #{tpu_custom_call.1} parent=11 // pred_check_branch
          %275 = sbr.rel (%p273) target = $region28
        $region27: #{tpu_custom_call.1} parent=11 // pred_region
          _
        $region28: #{tpu_custom_call.1} parent=11 // pred_fallthru
          _
        // Predicated region
        $region29: #{tpu_custom_call.1} parent=11 // pred_check
          %p276 = pneg %p154
        $region30: #{tpu_custom_call.1} parent=11 // pred_check_branch
          %278 = sbr.rel (%p276) target = $region32
        $region31: #{tpu_custom_call.1} parent=11 // pred_region
          %280 = vsyncadd [#allocation6], 0
          %s281 = sshll.u32 %s5, 4
          %s282 = int_to_ptr.hbm [resolvable:$true] %s281
          %s283 = sshll.u32 [#allocation7], 4
          %s284 = int_to_ptr.vmem [resolvable:$true] %s283
          %289 = dma.hbm_to_vmem [thread:$0]  %s282, 384, %s284, [#allocation6], 128, 128, 8
        $region32: #{tpu_custom_call.1} parent=11 // pred_fallthru
          _
        // Predicated region
        $region33: #{tpu_custom_call.1} parent=11 // pred_check
          %p290 = pneg %p175
        $region34: #{tpu_custom_call.1} parent=11 // pred_check_branch
          %292 = sbr.rel (%p290) target = $region36
        $region35: #{tpu_custom_call.1} parent=11 // pred_region
          _
        $region36: #{tpu_custom_call.1} parent=11 // pred_fallthru
          _
      $region12: #{tpu_custom_call.1} parent=5 // pred_fallthru
        _
      %p293 = scmp.lt.s32.totalorder %s23, 2
      // Predicated region
      $region37: #{tpu_custom_call.1} parent=5 // pred_check
        %p294 = pneg %p293
      $region38: #{tpu_custom_call.1} parent=5 // pred_check_branch
        %296 = sbr.rel (%p294) target = $region40
      $region39: #{tpu_custom_call.1} parent=5 // pred_region
        // Predicated region
        $region41: #{tpu_custom_call.1} parent=39 // pred_check
          %p297 = pneg %p43
        $region42: #{tpu_custom_call.1} parent=39 // pred_check_branch
          %299 = sbr.rel (%p297) target = $region44
        $region43: #{tpu_custom_call.1} parent=39 // pred_region
          %p300 = scmp.lt.s32.totalorder %s23, 1
          %s301 = scalar_select %p300, %s23, 1
          %s302 = smul.addr %s301, 3
          %s303 = smul.addr %s302, 8
          %s304 = scalar_lea.vmem %s0, %s303
        $region44: #{tpu_custom_call.1} parent=39 // pred_fallthru
          _
      $region40: #{tpu_custom_call.1} parent=5 // pred_fallthru
        _
      %p305 = scmp.le.s32.totalorder 1, %s23
      %p306 = scmp.lt.s32.totalorder %s23, 3
      %p307 = pnand %p305, %p306
      %p308 = pneg %p307
      // Predicated region
      $region45: #{tpu_custom_call.1} parent=5 // pred_check
        _
      $region46: #{tpu_custom_call.1} parent=5 // pred_check_branch
        %310 = sbr.rel (%p307) target = $region48
      $region47: #{tpu_custom_call.1} parent=5 // pred_region
        %s311 = ssub.s32 %s23, 1
        // Predicated region
        $region49: #{tpu_custom_call.1} parent=47 // pred_check
          %p312 = pneg %p70
        $region50: #{tpu_custom_call.1} parent=47 // pred_check_branch
          %314 = sbr.rel (%p312) target = $region52
        $region51: #{tpu_custom_call.1} parent=47 // pred_region
          %316 = dma.done [#allocation3], 512
        $region52: #{tpu_custom_call.1} parent=47 // pred_fallthru
          _
        // Predicated region
        $region53: #{tpu_custom_call.1} parent=47 // pred_check
          %p317 = pneg %p112
        $region54: #{tpu_custom_call.1} parent=47 // pred_check_branch
          %319 = sbr.rel (%p317) target = $region56
        $region55: #{tpu_custom_call.1} parent=47 // pred_region
          %321 = dma.done [#allocation6], 384
        $region56: #{tpu_custom_call.1} parent=47 // pred_fallthru
          _
        // Predicated region
        $region57: #{tpu_custom_call.1} parent=47 // pred_check
          %p322 = pneg %p154
        $region58: #{tpu_custom_call.1} parent=47 // pred_check_branch
          %324 = sbr.rel (%p322) target = $region60
        $region59: #{tpu_custom_call.1} parent=47 // pred_region
          %326 = dma.done [#allocation6], 384
        $region60: #{tpu_custom_call.1} parent=47 // pred_fallthru
          _
        %p327 = scmp.lt.s32.totalorder %s28, 1
        %s328 = scalar_select %p327, %s28, 1
        %s329 = smul.addr %s328, 3
        %s330 = smul.addr %s329, 8
        %s331 = scalar_lea.vmem %s0, %s330
        %p332 = pneg %p49
        %p333 = pneg %p46
        %p334 = pneg %p70
        %p335 = pneg %p67
        %p336 = pneg %p91
        %p337 = pneg %p88
        %p338 = pneg %p112
        %p339 = pneg %p109
        %p340 = pneg %p133
        %p341 = pneg %p130
        %p342 = pneg %p154
        %p343 = pneg %p151
        %p344 = pneg %p175
        %p345 = pneg %p172
        %p346 = pneg %p201
        %p347 = pneg %p198
        %s348 = sand.u32 %s188, 1
        %s349 = scalar_lea.sflag [#allocation4], %s348
        %s350 = sand.u32 %s188, 1
        %s351 = smul.addr %s350, 24
        %s352 = scalar_lea.vmem [#allocation8], %s351
        %p353 = pneg %p227
        %p354 = pneg %p224
        %s355 = sand.u32 %s214, 1
        %s356 = scalar_lea.sflag [#allocation10], %s355
        %s357 = sand.u32 %s214, 1
        %s358 = smul.addr %s357, 24
        %s359 = scalar_lea.vmem [#allocation9], %s358
        %p360 = scmp.lt.s32.totalorder %s28, 1
        %s361 = scalar_select %p360, %s28, 1
        %s362 = smul.addr %s361, 3
        %s363 = smul.addr %s362, 8
        %s364 = scalar_lea.vmem %s0, %s363
        %v365 = vld [vmem:[%s364] sm:$0xff]
        %v366 = vld [vmem:[%s364 + $0x8] sm:$0xff]
        %v367 = vld [vmem:[%s364 + $0x10] sm:$0xff]
        %v368 = vld [vmem:[#allocation2] sm:$0xff]
        %v369 = vld [vmem:[#allocation2 + $0x8] sm:$0xff]
        %v370 = vld [vmem:[#allocation2 + $0x10] sm:$0xff]
        %v371 = vld [vmem:[#allocation2 + $0x18] sm:$0xff]
        %v372 = vld [vmem:[%s2] sm:$0x1]
        %v374 = vperm.slane %v372, 0
        %vm376 = vcmask 261120
        %v378 = vsel %vm376, %v365, 0
        %v381 = vsel %vm376, %v366, 0
        %v384 = vsel %vm376, %v367, 0
        %386 = vmatpush.msra.mxu0 0.0
        %387 = vmatpush.msra.mxu0 0.0
        %388 = vmatpush.msra.mxu0 0.0
        %389 = vmatpush.msra.mxu0 0.0
        %390 = vmatpush.msra.mxu0 0.0
        %391 = vmatpush.msra.mxu0 0.0
        %392 = vmatpush.msra.mxu0 0.0
        %393 = vmatpush.msra.mxu0 0.0
        %394 = vmatpush.msra.mxu0 0.0
        %395 = vmatpush.msra.mxu0 0.0
        %396 = vmatpush.msra.mxu0 0.0
        %397 = vmatpush.msra.mxu0 0.0
        %v398 = vand.u32 %v371, 4294901760
        %399 = vmatpush.msra.mxu0 %v398
        %v400 = vand.u32 %v370, 4294901760
        %401 = vmatpush.msra.mxu0 %v400
        %v402 = vand.u32 %v369, 4294901760
        %403 = vmatpush.msra.mxu0 %v402
        %v404 = vand.u32 %v368, 4294901760
        %405 = vmatpush.msra.mxu0 %v404
        %v406 = vand.u32 %v378, 4294901760
        %v407 = vsub.f32 %v378, %v406
        %v408 = vand.u32 %v407, 4294901760
        %v409 = vsub.f32 %v407, %v408
        %v410 = vand.u32 %v409, 4294901760
        %411 = vmatmul.f32.gmra.mxu0 %v410
        %v412 = vpop.f32.mrf.mxu0
        %v413 = vadd.f32 %v374, %v412
        %v414 = vand.u32 %v381, 4294901760
        %v415 = vsub.f32 %v381, %v414
        %v416 = vand.u32 %v415, 4294901760
        %v417 = vsub.f32 %v415, %v416
        %v418 = vand.u32 %v417, 4294901760
        %419 = vmatmul.f32.gmra.mxu0 %v418
        %v420 = vpop.f32.mrf.mxu0
        %v421 = vadd.f32 %v374, %v420
        %v422 = vand.u32 %v384, 4294901760
        %v423 = vsub.f32 %v384, %v422
        %v424 = vand.u32 %v423, 4294901760
        %v425 = vsub.f32 %v423, %v424
        %v426 = vand.u32 %v425, 4294901760
        %427 = vmatmul.f32.gmra.mxu0 %v426
        %v428 = vpop.f32.mrf.mxu0
        %v429 = vadd.f32 %v374, %v428
        %430 = vdwg.mxu0
        %431 = vmatpush.msra.mxu0 0.0
        %432 = vmatpush.msra.mxu0 0.0
        %433 = vmatpush.msra.mxu0 0.0
        %434 = vmatpush.msra.mxu0 0.0
        %435 = vmatpush.msra.mxu0 0.0
        %436 = vmatpush.msra.mxu0 0.0
        %437 = vmatpush.msra.mxu0 0.0
        %438 = vmatpush.msra.mxu0 0.0
        %439 = vmatpush.msra.mxu0 0.0
        %440 = vmatpush.msra.mxu0 0.0
        %441 = vmatpush.msra.mxu0 0.0
        %442 = vmatpush.msra.mxu0 0.0
        %v443 = vand.u32 %v371, 4294901760
        %v444 = vsub.f32 %v371, %v443
        %v445 = vand.u32 %v444, 4294901760
        %v446 = vsub.f32 %v444, %v445
        %v447 = vand.u32 %v446, 4294901760
        %448 = vmatpush.msra.mxu0 %v447
        %v449 = vand.u32 %v370, 4294901760
        %v450 = vsub.f32 %v370, %v449
        %v451 = vand.u32 %v450, 4294901760
        %v452 = vsub.f32 %v450, %v451
        %v453 = vand.u32 %v452, 4294901760
        %454 = vmatpush.msra.mxu0 %v453
        %v455 = vand.u32 %v369, 4294901760
        %v456 = vsub.f32 %v369, %v455
        %v457 = vand.u32 %v456, 4294901760
        %v458 = vsub.f32 %v456, %v457
        %v459 = vand.u32 %v458, 4294901760
        %460 = vmatpush.msra.mxu0 %v459
        %v461 = vand.u32 %v368, 4294901760
        %v462 = vsub.f32 %v368, %v461
        %v463 = vand.u32 %v462, 4294901760
        %v464 = vsub.f32 %v462, %v463
        %v465 = vand.u32 %v464, 4294901760
        %466 = vmatpush.msra.mxu0 %v465
        %v467 = vand.u32 %v378, 4294901760
        %468 = vmatmul.f32.gmra.mxu0 %v467
        %v469 = vpop.f32.mrf.mxu0
        %v470 = vadd.f32 %v413, %v469
        %v471 = vand.u32 %v381, 4294901760
        %472 = vmatmul.f32.gmra.mxu0 %v471
        %v473 = vpop.f32.mrf.mxu0
        %v474 = vadd.f32 %v421, %v473
        %v475 = vand.u32 %v384, 4294901760
        %476 = vmatmul.f32.gmra.mxu0 %v475
        %v477 = vpop.f32.mrf.mxu0
        %v478 = vadd.f32 %v429, %v477
        %479 = vdwg.mxu0
        %480 = vmatpush.msra.mxu0 0.0
        %481 = vmatpush.msra.mxu0 0.0
        %482 = vmatpush.msra.mxu0 0.0
        %483 = vmatpush.msra.mxu0 0.0
        %484 = vmatpush.msra.mxu0 0.0
        %485 = vmatpush.msra.mxu0 0.0
        %486 = vmatpush.msra.mxu0 0.0
        %487 = vmatpush.msra.mxu0 0.0
        %488 = vmatpush.msra.mxu0 0.0
        %489 = vmatpush.msra.mxu0 0.0
        %490 = vmatpush.msra.mxu0 0.0
        %491 = vmatpush.msra.mxu0 0.0
        %v492 = vand.u32 %v371, 4294901760
        %v493 = vsub.f32 %v371, %v492
        %494 = vmatpush.msra.mxu0 %v493
        %v495 = vand.u32 %v370, 4294901760
        %v496 = vsub.f32 %v370, %v495
        %497 = vmatpush.msra.mxu0 %v496
        %v498 = vand.u32 %v369, 4294901760
        %v499 = vsub.f32 %v369, %v498
        %500 = vmatpush.msra.mxu0 %v499
        %v501 = vand.u32 %v368, 4294901760
        %v502 = vsub.f32 %v368, %v501
        %503 = vmatpush.msra.mxu0 %v502
        %v504 = vand.u32 %v378, 4294901760
        %v505 = vsub.f32 %v378, %v504
        %506 = vmatmul.f32.gmra.mxu0 %v505
        %v507 = vpop.f32.mrf.mxu0
        %v508 = vadd.f32 %v470, %v507
        %v509 = vand.u32 %v381, 4294901760
        %v510 = vsub.f32 %v381, %v509
        %511 = vmatmul.f32.gmra.mxu0 %v510
        %v512 = vpop.f32.mrf.mxu0
        %v513 = vadd.f32 %v474, %v512
        %v514 = vand.u32 %v384, 4294901760
        %v515 = vsub.f32 %v384, %v514
        %516 = vmatmul.f32.gmra.mxu0 %v515
        %v517 = vpop.f32.mrf.mxu0
        %v518 = vadd.f32 %v478, %v517
        %519 = vdwg.mxu0
        %520 = vmatpush.msra.mxu0 0.0
        %521 = vmatpush.msra.mxu0 0.0
        %522 = vmatpush.msra.mxu0 0.0
        %523 = vmatpush.msra.mxu0 0.0
        %524 = vmatpush.msra.mxu0 0.0
        %525 = vmatpush.msra.mxu0 0.0
        %526 = vmatpush.msra.mxu0 0.0
        %527 = vmatpush.msra.mxu0 0.0
        %528 = vmatpush.msra.mxu0 0.0
        %529 = vmatpush.msra.mxu0 0.0
        %530 = vmatpush.msra.mxu0 0.0
        %531 = vmatpush.msra.mxu0 0.0
        %v532 = vand.u32 %v371, 4294901760
        %533 = vmatpush.msra.mxu0 %v532
        %v534 = vand.u32 %v370, 4294901760
        %535 = vmatpush.msra.mxu0 %v534
        %v536 = vand.u32 %v369, 4294901760
        %537 = vmatpush.msra.mxu0 %v536
        %v538 = vand.u32 %v368, 4294901760
        %539 = vmatpush.msra.mxu0 %v538
        %v540 = vand.u32 %v378, 4294901760
        %v541 = vsub.f32 %v378, %v540
        %v542 = vand.u32 %v541, 4294901760
        %543 = vmatmul.f32.gmra.mxu0 %v542
        %v544 = vpop.f32.mrf.mxu0
        %v545 = vadd.f32 %v508, %v544
        %v546 = vand.u32 %v381, 4294901760
        %v547 = vsub.f32 %v381, %v546
        %v548 = vand.u32 %v547, 4294901760
        %549 = vmatmul.f32.gmra.mxu0 %v548
        %v550 = vpop.f32.mrf.mxu0
        %v551 = vadd.f32 %v513, %v550
        %v552 = vand.u32 %v384, 4294901760
        %v553 = vsub.f32 %v384, %v552
        %v554 = vand.u32 %v553, 4294901760
        %555 = vmatmul.f32.gmra.mxu0 %v554
        %v556 = vpop.f32.mrf.mxu0
        %v557 = vadd.f32 %v518, %v556
        %558 = vdwg.mxu0
        %559 = vmatpush.msra.mxu0 0.0
        %560 = vmatpush.msra.mxu0 0.0
        %561 = vmatpush.msra.mxu0 0.0
        %562 = vmatpush.msra.mxu0 0.0
        %563 = vmatpush.msra.mxu0 0.0
        %564 = vmatpush.msra.mxu0 0.0
        %565 = vmatpush.msra.mxu0 0.0
        %566 = vmatpush.msra.mxu0 0.0
        %567 = vmatpush.msra.mxu0 0.0
        %568 = vmatpush.msra.mxu0 0.0
        %569 = vmatpush.msra.mxu0 0.0
        %570 = vmatpush.msra.mxu0 0.0
        %v571 = vand.u32 %v371, 4294901760
        %v572 = vsub.f32 %v371, %v571
        %v573 = vand.u32 %v572, 4294901760
        %574 = vmatpush.msra.mxu0 %v573
        %v575 = vand.u32 %v370, 4294901760
        %v576 = vsub.f32 %v370, %v575
        %v577 = vand.u32 %v576, 4294901760
        %578 = vmatpush.msra.mxu0 %v577
        %v579 = vand.u32 %v369, 4294901760
        %v580 = vsub.f32 %v369, %v579
        %v581 = vand.u32 %v580, 4294901760
        %582 = vmatpush.msra.mxu0 %v581
        %v583 = vand.u32 %v368, 4294901760
        %v584 = vsub.f32 %v368, %v583
        %v585 = vand.u32 %v584, 4294901760
        %586 = vmatpush.msra.mxu0 %v585
        %v587 = vand.u32 %v378, 4294901760
        %588 = vmatmul.f32.gmra.mxu0 %v587
        %v589 = vpop.f32.mrf.mxu0
        %v590 = vadd.f32 %v545, %v589
        %v591 = vand.u32 %v381, 4294901760
        %592 = vmatmul.f32.gmra.mxu0 %v591
        %v593 = vpop.f32.mrf.mxu0
        %v594 = vadd.f32 %v551, %v593
        %v595 = vand.u32 %v384, 4294901760
        %596 = vmatmul.f32.gmra.mxu0 %v595
        %v597 = vpop.f32.mrf.mxu0
        %v598 = vadd.f32 %v557, %v597
        %599 = vdwg.mxu0
        %600 = vmatpush.msra.mxu0 0.0
        %601 = vmatpush.msra.mxu0 0.0
        %602 = vmatpush.msra.mxu0 0.0
        %603 = vmatpush.msra.mxu0 0.0
        %604 = vmatpush.msra.mxu0 0.0
        %605 = vmatpush.msra.mxu0 0.0
        %606 = vmatpush.msra.mxu0 0.0
        %607 = vmatpush.msra.mxu0 0.0
        %608 = vmatpush.msra.mxu0 0.0
        %609 = vmatpush.msra.mxu0 0.0
        %610 = vmatpush.msra.mxu0 0.0
        %611 = vmatpush.msra.mxu0 0.0
        %v612 = vand.u32 %v371, 4294901760
        %613 = vmatpush.msra.mxu0 %v612
        %v614 = vand.u32 %v370, 4294901760
        %615 = vmatpush.msra.mxu0 %v614
        %v616 = vand.u32 %v369, 4294901760
        %617 = vmatpush.msra.mxu0 %v616
        %v618 = vand.u32 %v368, 4294901760
        %619 = vmatpush.msra.mxu0 %v618
        %v620 = vand.u32 %v378, 4294901760
        %621 = vmatmul.f32.gmra.mxu0 %v620
        %v622 = vpop.f32.mrf.mxu0
        %v623 = vadd.f32 %v590, %v622
        %v624 = vand.u32 %v381, 4294901760
        %625 = vmatmul.f32.gmra.mxu0 %v624
        %v626 = vpop.f32.mrf.mxu0
        %v627 = vadd.f32 %v594, %v626
        %v628 = vand.u32 %v384, 4294901760
        %629 = vmatmul.f32.gmra.mxu0 %v628
        %v630 = vpop.f32.mrf.mxu0
        %v631 = vadd.f32 %v598, %v630
        %632 = vdwg.mxu0
        %v633 = vld [vmem:[#allocation5] sm:$0xff]
        %v634 = vld [vmem:[#allocation5 + $0x8] sm:$0xff]
        %v635 = vld [vmem:[#allocation5 + $0x10] sm:$0xff]
        %v636 = vld [vmem:[%s4] sm:$0xff]
        %v637 = vld [vmem:[%s4 + $0x8] sm:$0xff]
        %v638 = vld [vmem:[%s4 + $0x10] sm:$0xff]
        %640 = vset.pattern.permute.xlu0 0
        %641 = vperm.xlu0 %640, %v636
        %v642 = vpop.permute.xlu0 %641
        %645 = vset.pattern.permute.xlu0 0
        %646 = vperm.xlu0 %645, %v637
        %v647 = vpop.permute.xlu0 %646
        %650 = vset.pattern.permute.xlu0 0
        %651 = vperm.xlu0 %650, %v638
        %v652 = vpop.permute.xlu0 %651
        %vm654 = vcmask 195584
        %v656 = vsel %vm654, %v633, 0
        %v659 = vsel %vm654, %v634, 0
        %v662 = vsel %vm654, %v635, 0
        %664 = vmatpush.msra.mxu0 0.0
        %665 = vmatpush.msra.mxu0 0.0
        %666 = vmatpush.msra.mxu0 0.0
        %667 = vmatpush.msra.mxu0 0.0
        %668 = vmatpush.msra.mxu0 0.0
        %669 = vmatpush.msra.mxu0 0.0
        %670 = vmatpush.msra.mxu0 0.0
        %671 = vmatpush.msra.mxu0 0.0
        %672 = vmatpush.msra.mxu0 0.0
        %673 = vmatpush.msra.mxu0 0.0
        %674 = vmatpush.msra.mxu0 0.0
        %675 = vmatpush.msra.mxu0 0.0
        %676 = vmatpush.msra.mxu0 0.0
        %v677 = vand.u32 %v631, 4294901760
        %678 = vmatpush.msra.mxu0 %v677
        %v679 = vand.u32 %v627, 4294901760
        %680 = vmatpush.msra.mxu0 %v679
        %v681 = vand.u32 %v623, 4294901760
        %682 = vmatpush.msra.mxu0 %v681
        %v683 = vand.u32 %v656, 4294901760
        %v684 = vsub.f32 %v656, %v683
        %v685 = vand.u32 %v684, 4294901760
        %v686 = vsub.f32 %v684, %v685
        %v687 = vand.u32 %v686, 4294901760
        %688 = vmatmul.f32.gmra.mxu0 %v687
        %v689 = vpop.f32.mrf.mxu0
        %v690 = vadd.f32 %v642, %v689
        %v691 = vand.u32 %v659, 4294901760
        %v692 = vsub.f32 %v659, %v691
        %v693 = vand.u32 %v692, 4294901760
        %v694 = vsub.f32 %v692, %v693
        %v695 = vand.u32 %v694, 4294901760
        %696 = vmatmul.f32.gmra.mxu0 %v695
        %v697 = vpop.f32.mrf.mxu0
        %v698 = vadd.f32 %v647, %v697
        %v699 = vand.u32 %v662, 4294901760
        %v700 = vsub.f32 %v662, %v699
        %v701 = vand.u32 %v700, 4294901760
        %v702 = vsub.f32 %v700, %v701
        %v703 = vand.u32 %v702, 4294901760
        %704 = vmatmul.f32.gmra.mxu0 %v703
        %v705 = vpop.f32.mrf.mxu0
        %v706 = vadd.f32 %v652, %v705
        %707 = vdwg.mxu0
        %708 = vmatpush.msra.mxu0 0.0
        %709 = vmatpush.msra.mxu0 0.0
        %710 = vmatpush.msra.mxu0 0.0
        %711 = vmatpush.msra.mxu0 0.0
        %712 = vmatpush.msra.mxu0 0.0
        %713 = vmatpush.msra.mxu0 0.0
        %714 = vmatpush.msra.mxu0 0.0
        %715 = vmatpush.msra.mxu0 0.0
        %716 = vmatpush.msra.mxu0 0.0
        %717 = vmatpush.msra.mxu0 0.0
        %718 = vmatpush.msra.mxu0 0.0
        %719 = vmatpush.msra.mxu0 0.0
        %720 = vmatpush.msra.mxu0 0.0
        %v721 = vand.u32 %v631, 4294901760
        %v722 = vsub.f32 %v631, %v721
        %v723 = vand.u32 %v722, 4294901760
        %v724 = vsub.f32 %v722, %v723
        %v725 = vand.u32 %v724, 4294901760
        %726 = vmatpush.msra.mxu0 %v725
        %v727 = vand.u32 %v627, 4294901760
        %v728 = vsub.f32 %v627, %v727
        %v729 = vand.u32 %v728, 4294901760
        %v730 = vsub.f32 %v728, %v729
        %v731 = vand.u32 %v730, 4294901760
        %732 = vmatpush.msra.mxu0 %v731
        %v733 = vand.u32 %v623, 4294901760
        %v734 = vsub.f32 %v623, %v733
        %v735 = vand.u32 %v734, 4294901760
        %v736 = vsub.f32 %v734, %v735
        %v737 = vand.u32 %v736, 4294901760
        %738 = vmatpush.msra.mxu0 %v737
        %v739 = vand.u32 %v656, 4294901760
        %740 = vmatmul.f32.gmra.mxu0 %v739
        %v741 = vpop.f32.mrf.mxu0
        %v742 = vadd.f32 %v690, %v741
        %v743 = vand.u32 %v659, 4294901760
        %744 = vmatmul.f32.gmra.mxu0 %v743
        %v745 = vpop.f32.mrf.mxu0
        %v746 = vadd.f32 %v698, %v745
        %v747 = vand.u32 %v662, 4294901760
        %748 = vmatmul.f32.gmra.mxu0 %v747
        %v749 = vpop.f32.mrf.mxu0
        %v750 = vadd.f32 %v706, %v749
        %751 = vdwg.mxu0
        %752 = vmatpush.msra.mxu0 0.0
        %753 = vmatpush.msra.mxu0 0.0
        %754 = vmatpush.msra.mxu0 0.0
        %755 = vmatpush.msra.mxu0 0.0
        %756 = vmatpush.msra.mxu0 0.0
        %757 = vmatpush.msra.mxu0 0.0
        %758 = vmatpush.msra.mxu0 0.0
        %759 = vmatpush.msra.mxu0 0.0
        %760 = vmatpush.msra.mxu0 0.0
        %761 = vmatpush.msra.mxu0 0.0
        %762 = vmatpush.msra.mxu0 0.0
        %763 = vmatpush.msra.mxu0 0.0
        %764 = vmatpush.msra.mxu0 0.0
        %v765 = vand.u32 %v631, 4294901760
        %v766 = vsub.f32 %v631, %v765
        %767 = vmatpush.msra.mxu0 %v766
        %v768 = vand.u32 %v627, 4294901760
        %v769 = vsub.f32 %v627, %v768
        %770 = vmatpush.msra.mxu0 %v769
        %v771 = vand.u32 %v623, 4294901760
        %v772 = vsub.f32 %v623, %v771
        %773 = vmatpush.msra.mxu0 %v772
        %v774 = vand.u32 %v656, 4294901760
        %v775 = vsub.f32 %v656, %v774
        %776 = vmatmul.f32.gmra.mxu0 %v775
        %v777 = vpop.f32.mrf.mxu0
        %v778 = vadd.f32 %v742, %v777
        %v779 = vand.u32 %v659, 4294901760
        %v780 = vsub.f32 %v659, %v779
        %781 = vmatmul.f32.gmra.mxu0 %v780
        %v782 = vpop.f32.mrf.mxu0
        %v783 = vadd.f32 %v746, %v782
        %v784 = vand.u32 %v662, 4294901760
        %v785 = vsub.f32 %v662, %v784
        %786 = vmatmul.f32.gmra.mxu0 %v785
        %v787 = vpop.f32.mrf.mxu0
        %v788 = vadd.f32 %v750, %v787
        %789 = vdwg.mxu0
        %790 = vmatpush.msra.mxu0 0.0
        %791 = vmatpush.msra.mxu0 0.0
        %792 = vmatpush.msra.mxu0 0.0
        %793 = vmatpush.msra.mxu0 0.0
        %794 = vmatpush.msra.mxu0 0.0
        %795 = vmatpush.msra.mxu0 0.0
        %796 = vmatpush.msra.mxu0 0.0
        %797 = vmatpush.msra.mxu0 0.0
        %798 = vmatpush.msra.mxu0 0.0
        %799 = vmatpush.msra.mxu0 0.0
        %800 = vmatpush.msra.mxu0 0.0
        %801 = vmatpush.msra.mxu0 0.0
        %802 = vmatpush.msra.mxu0 0.0
        %v803 = vand.u32 %v631, 4294901760
        %804 = vmatpush.msra.mxu0 %v803
        %v805 = vand.u32 %v627, 4294901760
        %806 = vmatpush.msra.mxu0 %v805
        %v807 = vand.u32 %v623, 4294901760
        %808 = vmatpush.msra.mxu0 %v807
        %v809 = vand.u32 %v656, 4294901760
        %v810 = vsub.f32 %v656, %v809
        %v811 = vand.u32 %v810, 4294901760
        %812 = vmatmul.f32.gmra.mxu0 %v811
        %v813 = vpop.f32.mrf.mxu0
        %v814 = vadd.f32 %v778, %v813
        %v815 = vand.u32 %v659, 4294901760
        %v816 = vsub.f32 %v659, %v815
        %v817 = vand.u32 %v816, 4294901760
        %818 = vmatmul.f32.gmra.mxu0 %v817
        %v819 = vpop.f32.mrf.mxu0
        %v820 = vadd.f32 %v783, %v819
        %v821 = vand.u32 %v662, 4294901760
        %v822 = vsub.f32 %v662, %v821
        %v823 = vand.u32 %v822, 4294901760
        %824 = vmatmul.f32.gmra.mxu0 %v823
        %v825 = vpop.f32.mrf.mxu0
        %v826 = vadd.f32 %v788, %v825
        %827 = vdwg.mxu0
        %828 = vmatpush.msra.mxu0 0.0
        %829 = vmatpush.msra.mxu0 0.0
        %830 = vmatpush.msra.mxu0 0.0
        %831 = vmatpush.msra.mxu0 0.0
        %832 = vmatpush.msra.mxu0 0.0
        %833 = vmatpush.msra.mxu0 0.0
        %834 = vmatpush.msra.mxu0 0.0
        %835 = vmatpush.msra.mxu0 0.0
        %836 = vmatpush.msra.mxu0 0.0
        %837 = vmatpush.msra.mxu0 0.0
        %838 = vmatpush.msra.mxu0 0.0
        %839 = vmatpush.msra.mxu0 0.0
        %840 = vmatpush.msra.mxu0 0.0
        %v841 = vand.u32 %v631, 4294901760
        %v842 = vsub.f32 %v631, %v841
        %v843 = vand.u32 %v842, 4294901760
        %844 = vmatpush.msra.mxu0 %v843
        %v845 = vand.u32 %v627, 4294901760
        %v846 = vsub.f32 %v627, %v845
        %v847 = vand.u32 %v846, 4294901760
        %848 = vmatpush.msra.mxu0 %v847
        %v849 = vand.u32 %v623, 4294901760
        %v850 = vsub.f32 %v623, %v849
        %v851 = vand.u32 %v850, 4294901760
        %852 = vmatpush.msra.mxu0 %v851
        %v853 = vand.u32 %v656, 4294901760
        %854 = vmatmul.f32.gmra.mxu0 %v853
        %v855 = vpop.f32.mrf.mxu0
        %v856 = vadd.f32 %v814, %v855
        %v857 = vand.u32 %v659, 4294901760
        %858 = vmatmul.f32.gmra.mxu0 %v857
        %v859 = vpop.f32.mrf.mxu0
        %v860 = vadd.f32 %v820, %v859
        %v861 = vand.u32 %v662, 4294901760
        %862 = vmatmul.f32.gmra.mxu0 %v861
        %v863 = vpop.f32.mrf.mxu0
        %v864 = vadd.f32 %v826, %v863
        %865 = vdwg.mxu0
        %866 = vmatpush.msra.mxu0 0.0
        %867 = vmatpush.msra.mxu0 0.0
        %868 = vmatpush.msra.mxu0 0.0
        %869 = vmatpush.msra.mxu0 0.0
        %870 = vmatpush.msra.mxu0 0.0
        %871 = vmatpush.msra.mxu0 0.0
        %872 = vmatpush.msra.mxu0 0.0
        %873 = vmatpush.msra.mxu0 0.0
        %874 = vmatpush.msra.mxu0 0.0
        %875 = vmatpush.msra.mxu0 0.0
        %876 = vmatpush.msra.mxu0 0.0
        %877 = vmatpush.msra.mxu0 0.0
        %878 = vmatpush.msra.mxu0 0.0
        %v879 = vand.u32 %v631, 4294901760
        %880 = vmatpush.msra.mxu0 %v879
        %v881 = vand.u32 %v627, 4294901760
        %882 = vmatpush.msra.mxu0 %v881
        %v883 = vand.u32 %v623, 4294901760
        %884 = vmatpush.msra.mxu0 %v883
        %v885 = vand.u32 %v656, 4294901760
        %886 = vmatmul.f32.gmra.mxu0 %v885
        %v887 = vpop.f32.mrf.mxu0
        %v888 = vadd.f32 %v856, %v887
        %v889 = vand.u32 %v659, 4294901760
        %890 = vmatmul.f32.gmra.mxu0 %v889
        %v891 = vpop.f32.mrf.mxu0
        %v892 = vadd.f32 %v860, %v891
        %v893 = vand.u32 %v662, 4294901760
        %894 = vmatmul.f32.gmra.mxu0 %v893
        %v895 = vpop.f32.mrf.mxu0
        %v896 = vadd.f32 %v864, %v895
        %897 = vdwg.mxu0
        %v898 = vmax.f32 %v888, 0.0
        %v899 = vmax.f32 %v892, 0.0
        %v900 = vmax.f32 %v896, 0.0
        %v901 = vld [vmem:[#allocation7] sm:$0xff]
        %v902 = vld [vmem:[#allocation7 + $0x8] sm:$0xff]
        %v903 = vld [vmem:[#allocation7 + $0x10] sm:$0xff]
        %v904 = vld [vmem:[%s6] sm:$0xff]
        %v905 = vld [vmem:[%s6 + $0x8] sm:$0xff]
        %v906 = vld [vmem:[%s6 + $0x10] sm:$0xff]
        %908 = vset.pattern.permute.xlu0 0
        %909 = vperm.xlu0 %908, %v904
        %v910 = vpop.permute.xlu0 %909
        %913 = vset.pattern.permute.xlu0 0
        %914 = vperm.xlu0 %913, %v905
        %v915 = vpop.permute.xlu0 %914
        %918 = vset.pattern.permute.xlu0 0
        %919 = vperm.xlu0 %918, %v906
        %v920 = vpop.permute.xlu0 %919
        %v923 = vsel %vm654, %v901, 0
        %v926 = vsel %vm654, %v902, 0
        %v929 = vsel %vm654, %v903, 0
        %931 = vmatpush.msra.mxu0 0.0
        %932 = vmatpush.msra.mxu0 0.0
        %933 = vmatpush.msra.mxu0 0.0
        %934 = vmatpush.msra.mxu0 0.0
        %935 = vmatpush.msra.mxu0 0.0
        %936 = vmatpush.msra.mxu0 0.0
        %937 = vmatpush.msra.mxu0 0.0
        %938 = vmatpush.msra.mxu0 0.0
        %939 = vmatpush.msra.mxu0 0.0
        %940 = vmatpush.msra.mxu0 0.0
        %941 = vmatpush.msra.mxu0 0.0
        %942 = vmatpush.msra.mxu0 0.0
        %943 = vmatpush.msra.mxu0 0.0
        %v944 = vand.u32 %v900, 4294901760
        %945 = vmatpush.msra.mxu0 %v944
        %v946 = vand.u32 %v899, 4294901760
        %947 = vmatpush.msra.mxu0 %v946
        %v948 = vand.u32 %v898, 4294901760
        %949 = vmatpush.msra.mxu0 %v948
        %v950 = vand.u32 %v923, 4294901760
        %v951 = vsub.f32 %v923, %v950
        %v952 = vand.u32 %v951, 4294901760
        %v953 = vsub.f32 %v951, %v952
        %v954 = vand.u32 %v953, 4294901760
        %955 = vmatmul.f32.gmra.mxu0 %v954
        %v956 = vpop.f32.mrf.mxu0
        %v957 = vadd.f32 %v910, %v956
        %v958 = vand.u32 %v926, 4294901760
        %v959 = vsub.f32 %v926, %v958
        %v960 = vand.u32 %v959, 4294901760
        %v961 = vsub.f32 %v959, %v960
        %v962 = vand.u32 %v961, 4294901760
        %963 = vmatmul.f32.gmra.mxu0 %v962
        %v964 = vpop.f32.mrf.mxu0
        %v965 = vadd.f32 %v915, %v964
        %v966 = vand.u32 %v929, 4294901760
        %v967 = vsub.f32 %v929, %v966
        %v968 = vand.u32 %v967, 4294901760
        %v969 = vsub.f32 %v967, %v968
        %v970 = vand.u32 %v969, 4294901760
        %971 = vmatmul.f32.gmra.mxu0 %v970
        %v972 = vpop.f32.mrf.mxu0
        %v973 = vadd.f32 %v920, %v972
        %974 = vdwg.mxu0
        %975 = vmatpush.msra.mxu0 0.0
        %976 = vmatpush.msra.mxu0 0.0
        %977 = vmatpush.msra.mxu0 0.0
        %978 = vmatpush.msra.mxu0 0.0
        %979 = vmatpush.msra.mxu0 0.0
        %980 = vmatpush.msra.mxu0 0.0
        %981 = vmatpush.msra.mxu0 0.0
        %982 = vmatpush.msra.mxu0 0.0
        %983 = vmatpush.msra.mxu0 0.0
        %984 = vmatpush.msra.mxu0 0.0
        %985 = vmatpush.msra.mxu0 0.0
        %986 = vmatpush.msra.mxu0 0.0
        %987 = vmatpush.msra.mxu0 0.0
        %v988 = vand.u32 %v900, 4294901760
        %v989 = vsub.f32 %v900, %v988
        %v990 = vand.u32 %v989, 4294901760
        %v991 = vsub.f32 %v989, %v990
        %v992 = vand.u32 %v991, 4294901760
        %993 = vmatpush.msra.mxu0 %v992
        %v994 = vand.u32 %v899, 4294901760
        %v995 = vsub.f32 %v899, %v994
        %v996 = vand.u32 %v995, 4294901760
        %v997 = vsub.f32 %v995, %v996
        %v998 = vand.u32 %v997, 4294901760
        %999 = vmatpush.msra.mxu0 %v998
        %v1000 = vand.u32 %v898, 4294901760
        %v1001 = vsub.f32 %v898, %v1000
        %v1002 = vand.u32 %v1001, 4294901760
        %v1003 = vsub.f32 %v1001, %v1002
        %v1004 = vand.u32 %v1003, 4294901760
        %1005 = vmatpush.msra.mxu0 %v1004
        %v1006 = vand.u32 %v923, 4294901760
        %1007 = vmatmul.f32.gmra.mxu0 %v1006
        %v1008 = vpop.f32.mrf.mxu0
        %v1009 = vadd.f32 %v957, %v1008
        %v1010 = vand.u32 %v926, 4294901760
        %1011 = vmatmul.f32.gmra.mxu0 %v1010
        %v1012 = vpop.f32.mrf.mxu0
        %v1013 = vadd.f32 %v965, %v1012
        %v1014 = vand.u32 %v929, 4294901760
        %1015 = vmatmul.f32.gmra.mxu0 %v1014
        %v1016 = vpop.f32.mrf.mxu0
        %v1017 = vadd.f32 %v973, %v1016
        %1018 = vdwg.mxu0
        %1019 = vmatpush.msra.mxu0 0.0
        %1020 = vmatpush.msra.mxu0 0.0
        %1021 = vmatpush.msra.mxu0 0.0
        %1022 = vmatpush.msra.mxu0 0.0
        %1023 = vmatpush.msra.mxu0 0.0
        %1024 = vmatpush.msra.mxu0 0.0
        %1025 = vmatpush.msra.mxu0 0.0
        %1026 = vmatpush.msra.mxu0 0.0
        %1027 = vmatpush.msra.mxu0 0.0
        %1028 = vmatpush.msra.mxu0 0.0
        %1029 = vmatpush.msra.mxu0 0.0
        %1030 = vmatpush.msra.mxu0 0.0
        %1031 = vmatpush.msra.mxu0 0.0
        %v1032 = vand.u32 %v900, 4294901760
        %v1033 = vsub.f32 %v900, %v1032
        %1034 = vmatpush.msra.mxu0 %v1033
        %v1035 = vand.u32 %v899, 4294901760
        %v1036 = vsub.f32 %v899, %v1035
        %1037 = vmatpush.msra.mxu0 %v1036
        %v1038 = vand.u32 %v898, 4294901760
        %v1039 = vsub.f32 %v898, %v1038
        %1040 = vmatpush.msra.mxu0 %v1039
        %v1041 = vand.u32 %v923, 4294901760
        %v1042 = vsub.f32 %v923, %v1041
        %1043 = vmatmul.f32.gmra.mxu0 %v1042
        %v1044 = vpop.f32.mrf.mxu0
        %v1045 = vadd.f32 %v1009, %v1044
        %v1046 = vand.u32 %v926, 4294901760
        %v1047 = vsub.f32 %v926, %v1046
        %1048 = vmatmul.f32.gmra.mxu0 %v1047
        %v1049 = vpop.f32.mrf.mxu0
        %v1050 = vadd.f32 %v1013, %v1049
        %v1051 = vand.u32 %v929, 4294901760
        %v1052 = vsub.f32 %v929, %v1051
        %1053 = vmatmul.f32.gmra.mxu0 %v1052
        %v1054 = vpop.f32.mrf.mxu0
        %v1055 = vadd.f32 %v1017, %v1054
        %1056 = vdwg.mxu0
        %1057 = vmatpush.msra.mxu0 0.0
        %1058 = vmatpush.msra.mxu0 0.0
        %1059 = vmatpush.msra.mxu0 0.0
        %1060 = vmatpush.msra.mxu0 0.0
        %1061 = vmatpush.msra.mxu0 0.0
        %1062 = vmatpush.msra.mxu0 0.0
        %1063 = vmatpush.msra.mxu0 0.0
        %1064 = vmatpush.msra.mxu0 0.0
        %1065 = vmatpush.msra.mxu0 0.0
        %1066 = vmatpush.msra.mxu0 0.0
        %1067 = vmatpush.msra.mxu0 0.0
        %1068 = vmatpush.msra.mxu0 0.0
        %1069 = vmatpush.msra.mxu0 0.0
        %v1070 = vand.u32 %v900, 4294901760
        %1071 = vmatpush.msra.mxu0 %v1070
        %v1072 = vand.u32 %v899, 4294901760
        %1073 = vmatpush.msra.mxu0 %v1072
        %v1074 = vand.u32 %v898, 4294901760
        %1075 = vmatpush.msra.mxu0 %v1074
        %v1076 = vand.u32 %v923, 4294901760
        %v1077 = vsub.f32 %v923, %v1076
        %v1078 = vand.u32 %v1077, 4294901760
        %1079 = vmatmul.f32.gmra.mxu0 %v1078
        %v1080 = vpop.f32.mrf.mxu0
        %v1081 = vadd.f32 %v1045, %v1080
        %v1082 = vand.u32 %v926, 4294901760
        %v1083 = vsub.f32 %v926, %v1082
        %v1084 = vand.u32 %v1083, 4294901760
        %1085 = vmatmul.f32.gmra.mxu0 %v1084
        %v1086 = vpop.f32.mrf.mxu0
        %v1087 = vadd.f32 %v1050, %v1086
        %v1088 = vand.u32 %v929, 4294901760
        %v1089 = vsub.f32 %v929, %v1088
        %v1090 = vand.u32 %v1089, 4294901760
        %1091 = vmatmul.f32.gmra.mxu0 %v1090
        %v1092 = vpop.f32.mrf.mxu0
        %v1093 = vadd.f32 %v1055, %v1092
        %1094 = vdwg.mxu0
        %1095 = vmatpush.msra.mxu0 0.0
        %1096 = vmatpush.msra.mxu0 0.0
        %1097 = vmatpush.msra.mxu0 0.0
        %1098 = vmatpush.msra.mxu0 0.0
        %1099 = vmatpush.msra.mxu0 0.0
        %1100 = vmatpush.msra.mxu0 0.0
        %1101 = vmatpush.msra.mxu0 0.0
        %1102 = vmatpush.msra.mxu0 0.0
        %1103 = vmatpush.msra.mxu0 0.0
        %1104 = vmatpush.msra.mxu0 0.0
        %1105 = vmatpush.msra.mxu0 0.0
        %1106 = vmatpush.msra.mxu0 0.0
        %1107 = vmatpush.msra.mxu0 0.0
        %v1108 = vand.u32 %v900, 4294901760
        %v1109 = vsub.f32 %v900, %v1108
        %v1110 = vand.u32 %v1109, 4294901760
        %1111 = vmatpush.msra.mxu0 %v1110
        %v1112 = vand.u32 %v899, 4294901760
        %v1113 = vsub.f32 %v899, %v1112
        %v1114 = vand.u32 %v1113, 4294901760
        %1115 = vmatpush.msra.mxu0 %v1114
        %v1116 = vand.u32 %v898, 4294901760
        %v1117 = vsub.f32 %v898, %v1116
        %v1118 = vand.u32 %v1117, 4294901760
        %1119 = vmatpush.msra.mxu0 %v1118
        %v1120 = vand.u32 %v923, 4294901760
        %1121 = vmatmul.f32.gmra.mxu0 %v1120
        %v1122 = vpop.f32.mrf.mxu0
        %v1123 = vadd.f32 %v1081, %v1122
        %v1124 = vand.u32 %v926, 4294901760
        %1125 = vmatmul.f32.gmra.mxu0 %v1124
        %v1126 = vpop.f32.mrf.mxu0
        %v1127 = vadd.f32 %v1087, %v1126
        %v1128 = vand.u32 %v929, 4294901760
        %1129 = vmatmul.f32.gmra.mxu0 %v1128
        %v1130 = vpop.f32.mrf.mxu0
        %v1131 = vadd.f32 %v1093, %v1130
        %1132 = vdwg.mxu0
        %1133 = vmatpush.msra.mxu0 0.0
        %1134 = vmatpush.msra.mxu0 0.0
        %1135 = vmatpush.msra.mxu0 0.0
        %1136 = vmatpush.msra.mxu0 0.0
        %1137 = vmatpush.msra.mxu0 0.0
        %1138 = vmatpush.msra.mxu0 0.0
        %1139 = vmatpush.msra.mxu0 0.0
        %1140 = vmatpush.msra.mxu0 0.0
        %1141 = vmatpush.msra.mxu0 0.0
        %1142 = vmatpush.msra.mxu0 0.0
        %1143 = vmatpush.msra.mxu0 0.0
        %1144 = vmatpush.msra.mxu0 0.0
        %1145 = vmatpush.msra.mxu0 0.0
        %v1146 = vand.u32 %v900, 4294901760
        %1147 = vmatpush.msra.mxu0 %v1146
        %v1148 = vand.u32 %v899, 4294901760
        %1149 = vmatpush.msra.mxu0 %v1148
        %v1150 = vand.u32 %v898, 4294901760
        %1151 = vmatpush.msra.mxu0 %v1150
        %v1152 = vand.u32 %v923, 4294901760
        %1153 = vmatmul.f32.gmra.mxu0 %v1152
        %v1154 = vpop.f32.mrf.mxu0
        %v1155 = vadd.f32 %v1123, %v1154
        %v1156 = vand.u32 %v926, 4294901760
        %1157 = vmatmul.f32.gmra.mxu0 %v1156
        %v1158 = vpop.f32.mrf.mxu0
        %v1159 = vadd.f32 %v1127, %v1158
        %v1160 = vand.u32 %v929, 4294901760
        %1161 = vmatmul.f32.gmra.mxu0 %v1160
        %v1162 = vpop.f32.mrf.mxu0
        %v1163 = vadd.f32 %v1131, %v1162
        %1164 = vdwg.mxu0
        %1165 = vst.msk [vmem:[%s352] sm:$0xff] %vm376, %v898
        %1166 = vst.msk [vmem:[%s352 + $0x8] sm:$0xff] %vm376, %v899
        %1167 = vst.msk [vmem:[%s352 + $0x10] sm:$0xff] %vm376, %v900
        %1168 = vst.msk [vmem:[%s359] sm:$0xff] %vm376, %v1155
        %1169 = vst.msk [vmem:[%s359 + $0x8] sm:$0xff] %vm376, %v1159
        %1170 = vst.msk [vmem:[%s359 + $0x10] sm:$0xff] %vm376, %v1163
        %s1171 = sand.u32 %s188, 1
        %s1172 = scalar_lea.sflag [#allocation4], %s1171
        %s1173 = sand.u32 %s188, 1
        %s1174 = smul.addr %s1173, 24
        %s1175 = scalar_lea.vmem [#allocation8], %s1174
        %s1176 = sand.u32 %s214, 1
        %s1177 = scalar_lea.sflag [#allocation10], %s1176
        %s1178 = sand.u32 %s214, 1
        %s1179 = smul.addr %s1178, 24
        %s1180 = scalar_lea.vmem [#allocation9], %s1179
        // Predicated region
        $region61: #{tpu_custom_call.1} parent=47 // pred_check
          %p1181 = pneg %p198
        $region62: #{tpu_custom_call.1} parent=47 // pred_check_branch
          %1183 = sbr.rel (%p1181) target = $region64
        $region63: #{tpu_custom_call.1} parent=47 // pred_region
          %1185 = vsyncadd %s1172, 0
          %s1186 = smul.addr %s28, 3
          %s1187 = smul.addr %s1186, 8
          %s1188 = scalar_lea.hbm %s7, %s1187
          %s1189 = sshll.u32 %s1175, 4
          %s1190 = int_to_ptr.vmem [resolvable:$true] %s1189
          %s1191 = sshll.u32 %s1188, 4
          %s1192 = int_to_ptr.hbm [resolvable:$true] %s1191
          %1197 = dma.vmem_to_hbm [thread:$0]  %s1190, 384, %s1192, %s1172, 128, 128, 8
        $region64: #{tpu_custom_call.1} parent=47 // pred_fallthru
          _
        // Predicated region
        $region65: #{tpu_custom_call.1} parent=47 // pred_check
          %p1198 = pneg %p224
        $region66: #{tpu_custom_call.1} parent=47 // pred_check_branch
          %1200 = sbr.rel (%p1198) target = $region68
        $region67: #{tpu_custom_call.1} parent=47 // pred_region
          %1202 = vsyncadd %s1177, 0
          %s1203 = smul.addr %s28, 3
          %s1204 = smul.addr %s1203, 8
          %s1205 = scalar_lea.hbm %s8, %s1204
          %s1206 = sshll.u32 %s1180, 4
          %s1207 = int_to_ptr.vmem [resolvable:$true] %s1206
          %s1208 = sshll.u32 %s1205, 4
          %s1209 = int_to_ptr.hbm [resolvable:$true] %s1208
          %1214 = dma.vmem_to_hbm [thread:$0]  %s1207, 384, %s1209, %s1177, 128, 128, 8
        $region68: #{tpu_custom_call.1} parent=47 // pred_fallthru
          _
      $region48: #{tpu_custom_call.1} parent=5 // pred_fallthru
        _
      %p1215 = scmp.le.s32.totalorder 2, %s23
      // Predicated region
      $region69: #{tpu_custom_call.1} parent=5 // pred_check
        %p1216 = pneg %p1215
      $region70: #{tpu_custom_call.1} parent=5 // pred_check_branch
        %1218 = sbr.rel (%p1216) target = $region72
      $region71: #{tpu_custom_call.1} parent=5 // pred_region
        %s1219 = ssub.s32 %s23, 2
        // Predicated region
        $region73: #{tpu_custom_call.1} parent=71 // pred_check
          %p1220 = pneg %p204
        $region74: #{tpu_custom_call.1} parent=71 // pred_check_branch
          %1222 = sbr.rel (%p1220) target = $region76
        $region75: #{tpu_custom_call.1} parent=71 // pred_region
          %s1223 = sand.u32 %s189, 1
          %s1224 = scalar_lea.sflag [#allocation4], %s1223
          %s1225 = sand.u32 %s189, 1
          %s1226 = smul.addr %s1225, 24
          %s1227 = scalar_lea.vmem [#allocation8], %s1226
          %1229 = dma.done %s1224, 384
        $region76: #{tpu_custom_call.1} parent=71 // pred_fallthru
          _
        // Predicated region
        $region77: #{tpu_custom_call.1} parent=71 // pred_check
          %p1230 = pneg %p230
        $region78: #{tpu_custom_call.1} parent=71 // pred_check_branch
          %1232 = sbr.rel (%p1230) target = $region80
        $region79: #{tpu_custom_call.1} parent=71 // pred_region
          %s1233 = sand.u32 %s215, 1
          %s1234 = scalar_lea.sflag [#allocation10], %s1233
          %s1235 = sand.u32 %s215, 1
          %s1236 = smul.addr %s1235, 24
          %s1237 = scalar_lea.vmem [#allocation9], %s1236
          %1239 = dma.done %s1234, 384
        $region80: #{tpu_custom_call.1} parent=71 // pred_fallthru
          _
      $region72: #{tpu_custom_call.1} parent=5 // pred_fallthru
        _
    $region6: #{tpu_custom_call.1} parent=1 // loop_footer
      %s27 = sadd.s32 1, %s23
    $region7: #{tpu_custom_call.1} parent=1 // loop_footer_branch
      %22 = sbr.rel target = $region3
    $region8: #{tpu_custom_call.1} parent=1 // loop_exit
      _
    %1240 = vsyncpa [#allocation3], 1
    %s1241 = scalar_lea.sflag [#allocation3], 1
    %1242 = vsyncpa %s1241, 1
    %1243 = vsyncpa [#allocation6], 1
    %1244 = vsyncpa [#allocation4], 1
    %s1245 = scalar_lea.sflag [#allocation4], 1
    %1246 = vsyncpa %s1245, 1
    %1247 = vsyncpa [#allocation10], 1
    %s1248 = scalar_lea.sflag [#allocation10], 1
    %1249 = vsyncpa %s1248, 1

</llo_original>
